<compile_context>
chip_gen: v6e
topology: v6e:2x2x1
jax: 0.10.0
libtpu: 0.0.40
codegen_flags: <defaults>
</compile_context>

<pallas_src>
import functools

import jax
import jax.numpy as jnp
from jax.experimental import pallas as pl
from jax.experimental.pallas import tpu as pltpu

K_IN = 28 * 28      # 784 — contraction dim, streamed unpadded (== full dim)
HID = 128
N_OUT = 10
N_PAD = 128         # lane-dense output width


def _round_up(x, m):
    return (x + m - 1) // m * m


def _mlp_kernel(x_ref, w1_ref, b1_ref, w2_ref, b2_ref, o_ref):
    # fc1: (tb, 784) bf16 @ (784, 128) bf16 -> f32 accumulation on the MXU.
    h = jnp.dot(x_ref[...], w1_ref[...], preferred_element_type=jnp.float32)
    h = jnp.maximum(h + b1_ref[...], 0.0)            # bias + ReLU in f32 (VPU)
    # fc2: (tb, 128) @ (128, 128) in f32 (tiny; keeps final-layer accuracy).
    out = jnp.dot(h, w2_ref[...], preferred_element_type=jnp.float32)
    out = out + b2_ref[...]
    o_ref[...] = out.astype(o_ref.dtype)             # lane-dense bf16 store


@functools.partial(jax.jit, static_argnames=("tile_b",))
def simple_nn_forward(x_nchw, w1, b1, w2, b2, tile_b=2048):
    """x_nchw: (B, 1, 28, 28). Returns (B, 10) float32 logits.

    w1: (784, 128), b1: (128,), w2: (128, 10), b2: (10,)  (transposed vs torch)
    """
    B = x_nchw.shape[0]
    # == torch .view(-1, 784); bf16 cast fuses with x's producer under jit.
    x2d = x_nchw.reshape(B, K_IN).astype(jnp.bfloat16)

    # Batch tile: multiple of 16 (bf16 sublane packing). Last block may be
    # partial (cdiv grid); out-of-bounds rows are never stored.
    tb = max(16, min(tile_b, _round_up(B, 16)))
    tb = _round_up(tb, 16)
    grid = (pl.cdiv(B, tb),)

    # Only fc2's tiny weight/bias are padded (10 -> 128 lanes) so the output
    # store is a full-width vst; x / w1 are streamed unpadded.
    w1_b = w1.astype(jnp.bfloat16)
    b1_r = b1.reshape(1, HID).astype(jnp.float32)
    w2_p = jnp.zeros((HID, N_PAD), jnp.float32).at[:, :N_OUT].set(w2)
    b2_p = jnp.zeros((1, N_PAD), jnp.float32).at[0, :N_OUT].set(b2)

    # Double-buffered VMEM estimate -> raise the scoped limit only as needed;
    # clamp to 56 MiB so it stays legal on v7x (64 MiB physical VMEM).
    est_vmem = (2 * tb * K_IN * 2            # x tiles (bf16, double-buffered)
                + 2 * tb * N_PAD * 2         # output tiles (bf16)
                + 2 * (K_IN * HID * 2 + HID * N_PAD * 4 + 2 * N_PAD * 4))
    vmem_limit = int(min(max(2 * est_vmem, 32 * 1024 * 1024),
                         56 * 1024 * 1024))

    cost = pl.CostEstimate(
        flops=2 * B * (K_IN * HID + HID * N_PAD),
        transcendentals=0,
        bytes_accessed=(x2d.size * 2 + w1_b.size * 2 + b1_r.size * 4
                        + w2_p.size * 4 + b2_p.size * 4 + B * N_PAD * 2),
    )

    out_padded = pl.pallas_call(
        _mlp_kernel,
        out_shape=jax.ShapeDtypeStruct((B, N_PAD), jnp.bfloat16),
        grid=grid,
        in_specs=[
            # batch-tiled activations: new tile each grid step (pipelined DMA)
            pl.BlockSpec((tb, K_IN), lambda i: (i, 0)),
            # weights / biases: grid-invariant -> DMA'd once, stay resident
            pl.BlockSpec((K_IN, HID), lambda i: (0, 0)),
            pl.BlockSpec((1, HID), lambda i: (0, 0)),
            pl.BlockSpec((HID, N_PAD), lambda i: (0, 0)),
            pl.BlockSpec((1, N_PAD), lambda i: (0, 0)),
        ],
        out_specs=pl.BlockSpec((tb, N_PAD), lambda i: (i, 0)),
        compiler_params=pltpu.CompilerParams(
            # NOTE: on v7x, if "parallel" does not split the batch axis across
            # both TensorCores, switch this axis to pltpu.CORE_PARALLEL.
            dimension_semantics=("parallel",),
            vmem_limit_bytes=vmem_limit,
        ),
        cost_estimate=cost,
    )(x2d, w1_b, b1_r, w2_p, b2_p)

    # Real logits. Slice + cast are tiny (B x 10); in a full pipeline fold
    # this into the consumer (e.g. the loss) instead of materializing it.
    return out_padded[:B, :N_OUT].astype(jnp.float32)


def init_params(key):
    """Deterministic PyTorch-style (uniform +-1/sqrt(fan_in)) init."""
    k1, k2, k3, k4 = jax.random.split(key, 4)
    lim1 = 1.0 / jnp.sqrt(jnp.float32(K_IN))
    lim2 = 1.0 / jnp.sqrt(jnp.float32(HID))
    # stored as (in, out) so the kernel computes x @ W
    w1 = jax.random.uniform(k1, (K_IN, HID), jnp.float32, -lim1, lim1)
    b1 = jax.random.uniform(k2, (HID,), jnp.float32, -lim1, lim1)
    w2 = jax.random.uniform(k3, (HID, N_OUT), jnp.float32, -lim2, lim2)
    b2 = jax.random.uniform(k4, (N_OUT,), jnp.float32, -lim2, lim2)
    return w1, b1, w2, b2


if __name__ == "__main__":
    key = jax.random.PRNGKey(0)
    kx, kp = jax.random.split(key)

    B = 2
    x = jax.random.normal(kx, (B, 1, 28, 28), jnp.float32)   # NCHW input
    w1, b1, w2, b2 = init_params(kp)

    logits = jax.block_until_ready(simple_nn_forward(x, w1, b1, w2, b2))

    # Pure-JAX f32 reference of the same math (bf16 streaming => loose tol).
    x2d = x.reshape(B, -1)
    ref = jnp.maximum(x2d @ w1 + b1, 0.0) @ w2 + b2
    assert logits.shape == (B, N_OUT)
    assert jnp.allclose(logits, ref, atol=5e-2, rtol=5e-2), (
        float(jnp.max(jnp.abs(logits - ref))))

    # Exercise multiple grid steps plus a partial last block (masked store).
    B2 = 37
    x2 = jax.random.normal(kx, (B2, 1, 28, 28), jnp.float32)
    logits2 = jax.block_until_ready(
        simple_nn_forward(x2, w1, b1, w2, b2, tile_b=16))
    ref2 = jnp.maximum(x2.reshape(B2, -1) @ w1 + b1, 0.0) @ w2 + b2
    assert logits2.shape == (B2, N_OUT)
    assert jnp.allclose(logits2, ref2, atol=5e-2, rtol=5e-2), (
        float(jnp.max(jnp.abs(logits2 - ref2))))

    print("KERNEL_OK")
</pallas_src>

<mosaic_0001>
module attributes {stable_mosaic.version = 11 : i64} {
  func.func @_mlp_kernel(%arg0: i32, %arg1: memref<16x784xbf16, #tpu.memory_space<vmem>>, %arg2: memref<784x128xbf16, #tpu.memory_space<vmem>>, %arg3: memref<1x128xf32, #tpu.memory_space<vmem>>, %arg4: memref<128x128xf32, #tpu.memory_space<vmem>>, %arg5: memref<1x128xf32, #tpu.memory_space<vmem>>, %arg6: memref<16x128xbf16, #tpu.memory_space<vmem>>) attributes {dimension_semantics = [#tpu.dimension_semantics<parallel>], iteration_bounds = array<i64: 1>, scalar_prefetch = 0 : i64, scratch_operands = 0 : i64, tpu.core_type = #tpu.core_type<tc>, window_params = [{transform_indices = @transform_0, window_bounds = array<i64: 16, 784>}, {pipeline_mode = #tpu.pipeline_mode<synchronous>, transform_indices = @transform_1, window_bounds = array<i64: 784, 128>}, {pipeline_mode = #tpu.pipeline_mode<synchronous>, transform_indices = @transform_2, window_bounds = array<i64: 1, 128>}, {pipeline_mode = #tpu.pipeline_mode<synchronous>, transform_indices = @transform_3, window_bounds = array<i64: 128, 128>}, {pipeline_mode = #tpu.pipeline_mode<synchronous>, transform_indices = @transform_4, window_bounds = array<i64: 1, 128>}, {transform_indices = @transform_5, window_bounds = array<i64: 16, 128>}]} {
    %c0 = arith.constant 0 : index
    %c0_0 = arith.constant 0 : index
    %0 = vector.load %arg1[%c0, %c0_0] : memref<16x784xbf16, #tpu.memory_space<vmem>>, vector<16x784xbf16>
    %c0_1 = arith.constant 0 : index
    %c0_2 = arith.constant 0 : index
    %1 = vector.load %arg2[%c0_1, %c0_2] : memref<784x128xbf16, #tpu.memory_space<vmem>>, vector<784x128xbf16>
    %cst = arith.constant dense<0.000000e+00> : vector<16x128xf32>
    %2 = tpu.matmul %0, %1, %cst {dimension_numbers = #tpu.dot_dimension_numbers<[1], [0], [0], [1], [0, 0, 1, 1], [], []>} : vector<16x784xbf16>, vector<784x128xbf16>, vector<16x128xf32> -> vector<16x128xf32>
    %c0_3 = arith.constant 0 : index
    %c0_4 = arith.constant 0 : index
    %3 = vector.load %arg3[%c0_3, %c0_4] : memref<1x128xf32, #tpu.memory_space<vmem>>, vector<1x128xf32>
    %4 = vector.broadcast %3 : vector<1x128xf32> to vector<16x128xf32>
    %5 = arith.addf %2, %4 : vector<16x128xf32>
    %cst_5 = arith.constant 0.000000e+00 : f32
    %6 = vector.broadcast %cst_5 : f32 to vector<16x128xf32>
    %7 = arith.maximumf %5, %6 : vector<16x128xf32>
    %c0_6 = arith.constant 0 : index
    %c0_7 = arith.constant 0 : index
    %8 = vector.load %arg4[%c0_6, %c0_7] : memref<128x128xf32, #tpu.memory_space<vmem>>, vector<128x128xf32>
    %cst_8 = arith.constant dense<0.000000e+00> : vector<16x128xf32>
    %9 = tpu.matmul %7, %8, %cst_8 {dimension_numbers = #tpu.dot_dimension_numbers<[1], [0], [0], [1], [0, 0, 1, 1], [], []>} : vector<16x128xf32>, vector<128x128xf32>, vector<16x128xf32> -> vector<16x128xf32>
    %c0_9 = arith.constant 0 : index
    %c0_10 = arith.constant 0 : index
    %10 = vector.load %arg5[%c0_9, %c0_10] : memref<1x128xf32, #tpu.memory_space<vmem>>, vector<1x128xf32>
    %11 = vector.broadcast %10 : vector<1x128xf32> to vector<16x128xf32>
    %12 = arith.addf %9, %11 : vector<16x128xf32>
    %13 = arith.truncf %12 : vector<16x128xf32> to vector<16x128xbf16>
    %c0_11 = arith.constant 0 : index
    %c0_12 = arith.constant 0 : index
    %14 = vector.load %arg6[%c0_11, %c0_12] : memref<16x128xbf16, #tpu.memory_space<vmem>>, vector<16x128xbf16>
    tpu.vector_store %arg6[%c0_11, %c0_12], %13 {strides = array<i32>} : memref<16x128xbf16, #tpu.memory_space<vmem>>, vector<16x128xbf16>,
    return
  }
  func.func @transform_0(%arg0: i32) -> (i32, i32) {
    %c0_i32 = arith.constant 0 : i32
    %c0_i32_0 = arith.constant 0 : i32
    return %arg0, %c0_i32 : i32, i32
  }
  func.func @transform_1(%arg0: i32) -> (i32, i32) {
    %c0_i32 = arith.constant 0 : i32
    %c0_i32_0 = arith.constant 0 : i32
    %c0_i32_1 = arith.constant 0 : i32
    return %c0_i32, %c0_i32_0 : i32, i32
  }
  func.func @transform_2(%arg0: i32) -> (i32, i32) {
    %c0_i32 = arith.constant 0 : i32
    %c0_i32_0 = arith.constant 0 : i32
    %c0_i32_1 = arith.constant 0 : i32
    return %c0_i32, %c0_i32_0 : i32, i32
  }
  func.func @transform_3(%arg0: i32) -> (i32, i32) {
    %c0_i32 = arith.constant 0 : i32
    %c0_i32_0 = arith.constant 0 : i32
    %c0_i32_1 = arith.constant 0 : i32
    return %c0_i32, %c0_i32_0 : i32, i32
  }
  func.func @transform_4(%arg0: i32) -> (i32, i32) {
    %c0_i32 = arith.constant 0 : i32
    %c0_i32_0 = arith.constant 0 : i32
    %c0_i32_1 = arith.constant 0 : i32
    return %c0_i32, %c0_i32_0 : i32, i32
  }
  func.func @transform_5(%arg0: i32) -> (i32, i32) {
    %c0_i32 = arith.constant 0 : i32
    %c0_i32_0 = arith.constant 0 : i32
    return %arg0, %c0_i32 : i32, i32
  }
}

</mosaic_0001>

<llo_original>
// kernel: simple_nn_forward.1
$region0: #{simple_nn_forward.1}
  #allocation0 [shape = 'u32[]', space=smem, size = 0x4, offset = 0x4, fixed_abs, tag = 'smem constant byte address 0x4 - core index']
  #allocation1 [shape = 'u32[144,128]{1,0:T(1,128)}', space=vmem, size = 0x12000, scoped, tag = 'internal scratch']
  %s0 = inlined_call_operand.vmem [shape: bf16[2,784], index: 0, kind: input, shape index: {}]
  %s1 = inlined_call_operand.vmem [shape: bf16[784,128], index: 1, kind: input, shape index: {}]
  %s2 = inlined_call_operand.vmem [shape: f32[1,128], index: 2, kind: input, shape index: {}]
  %s3 = inlined_call_operand.vmem [shape: f32[128,128], index: 3, kind: input, shape index: {}]
  %s4 = inlined_call_operand.vmem [shape: f32[1,128], index: 4, kind: input, shape index: {}]
  %s5 = inlined_call_operand.vmem [shape: bf16[2,128], index: 5, kind: output, shape index: {}]
  %s6 = sld [smem:[#allocation0]]
  $region60: #{simple_nn_forward.1} parent=0
    _
  %s8 = ssub.s32 1, %s6
  %s9 = scalar_select 0, %s8, %s6
  $region1: #{simple_nn_forward.1} parent=0
    #allocation2 [shape = 'u8[4096]{0}', space=vmem, size = 0x1000, scoped, tag = 'output window, operand 0, single buffered']
    // Predicated region
    $region2: #{simple_nn_forward.1} parent=1 // pred_check
      _
    $region3: #{simple_nn_forward.1} parent=1 // pred_check_branch
      %11 = sbr.rel (0) target = $region5
    $region4: #{simple_nn_forward.1} parent=1 // pred_region
      _
    $region5: #{simple_nn_forward.1} parent=1 // pred_fallthru
      _
    // Predicated region
    $region6: #{simple_nn_forward.1} parent=1 // pred_check
      _
    $region7: #{simple_nn_forward.1} parent=1 // pred_check_branch
      %13 = sbr.rel (0) target = $region9
    $region8: #{simple_nn_forward.1} parent=1 // pred_region
      _
    $region9: #{simple_nn_forward.1} parent=1 // pred_fallthru
      _
    // Predicated region
    $region10: #{simple_nn_forward.1} parent=1 // pred_check
      _
    $region11: #{simple_nn_forward.1} parent=1 // pred_check_branch
      %15 = sbr.rel (0) target = $region13
    $region12: #{simple_nn_forward.1} parent=1 // pred_region
      _
    $region13: #{simple_nn_forward.1} parent=1 // pred_fallthru
      _
    // Predicated region
    $region14: #{simple_nn_forward.1} parent=1 // pred_check
      _
    $region15: #{simple_nn_forward.1} parent=1 // pred_check_branch
      %17 = sbr.rel (0) target = $region17
    $region16: #{simple_nn_forward.1} parent=1 // pred_region
      _
    $region17: #{simple_nn_forward.1} parent=1 // pred_fallthru
      _
    // Predicated region
    $region18: #{simple_nn_forward.1} parent=1 // pred_check
      _
    $region19: #{simple_nn_forward.1} parent=1 // pred_check_branch
      %19 = sbr.rel (0) target = $region21
    $region20: #{simple_nn_forward.1} parent=1 // pred_region
      _
    $region21: #{simple_nn_forward.1} parent=1 // pred_fallthru
      _
    %v21 = vld [vmem:[%s0] sm:$0x7f]
    %v22 = vld [vmem:[%s0 + $0x7] sm:$0x7f]
    %v23 = vld [vmem:[%s0 + $0xe] sm:$0x7f]
    %v24 = vld [vmem:[%s0 + $0x15] sm:$0x7f]
    %v25 = vld [vmem:[%s0 + $0x1c] sm:$0x7f]
    %v26 = vld [vmem:[%s0 + $0x23] sm:$0x7f]
    %v27 = vld [vmem:[%s0 + $0x2a] sm:$0x7f]
    %v28 = vld [vmem:[%s0 + $0x31] sm:$0x7f]
    %v29 = vld [vmem:[%s1] sm:$0xf]
    %v30 = vld [vmem:[%s1 + $0x4] sm:$0xf]
    %v31 = vld [vmem:[%s1 + $0x8] sm:$0xf]
    %v32 = vld [vmem:[%s1 + $0xc] sm:$0xf]
    %v33 = vld [vmem:[%s1 + $0x10] sm:$0xf]
    %v34 = vld [vmem:[%s1 + $0x14] sm:$0xf]
    %v35 = vld [vmem:[%s1 + $0x18] sm:$0xf]
    %v36 = vld [vmem:[%s1 + $0x1c] sm:$0xf]
    %v37 = vld [vmem:[%s1 + $0x20] sm:$0xf]
    %v38 = vld [vmem:[%s1 + $0x24] sm:$0xf]
    %v39 = vld [vmem:[%s1 + $0x28] sm:$0xf]
    %v40 = vld [vmem:[%s1 + $0x2c] sm:$0xf]
    %v41 = vld [vmem:[%s1 + $0x30] sm:$0xf]
    %v42 = vld [vmem:[%s1 + $0x34] sm:$0xf]
    %v43 = vld [vmem:[%s1 + $0x38] sm:$0xf]
    %v44 = vld [vmem:[%s1 + $0x3c] sm:$0xf]
    %v45 = vld [vmem:[%s1 + $0x40] sm:$0xf]
    %v46 = vld [vmem:[%s1 + $0x44] sm:$0xf]
    %v47 = vld [vmem:[%s1 + $0x48] sm:$0xf]
    %v48 = vld [vmem:[%s1 + $0x4c] sm:$0xf]
    %v49 = vld [vmem:[%s1 + $0x50] sm:$0xf]
    %v50 = vld [vmem:[%s1 + $0x54] sm:$0xf]
    %v51 = vld [vmem:[%s1 + $0x58] sm:$0xf]
    %v52 = vld [vmem:[%s1 + $0x5c] sm:$0xf]
    %v53 = vld [vmem:[%s1 + $0x60] sm:$0xf]
    %v54 = vld [vmem:[%s1 + $0x64] sm:$0xf]
    %v55 = vld [vmem:[%s1 + $0x68] sm:$0xf]
    %v56 = vld [vmem:[%s1 + $0x6c] sm:$0xf]
    %v57 = vld [vmem:[%s1 + $0x70] sm:$0xf]
    %v58 = vld [vmem:[%s1 + $0x74] sm:$0xf]
    %v59 = vld [vmem:[%s1 + $0x78] sm:$0xf]
    %v60 = vld [vmem:[%s1 + $0x7c] sm:$0xf]
    %v61 = vld [vmem:[%s1 + $0x80] sm:$0xf]
    %v62 = vld [vmem:[%s1 + $0x84] sm:$0xf]
    %v63 = vld [vmem:[%s1 + $0x88] sm:$0xf]
    %v64 = vld [vmem:[%s1 + $0x8c] sm:$0xf]
    %v65 = vld [vmem:[%s1 + $0x90] sm:$0xf]
    %v66 = vld [vmem:[%s1 + $0x94] sm:$0xf]
    %v67 = vld [vmem:[%s1 + $0x98] sm:$0xf]
    %v68 = vld [vmem:[%s1 + $0x9c] sm:$0xf]
    %v69 = vld [vmem:[%s1 + $0xa0] sm:$0xf]
    %v70 = vld [vmem:[%s1 + $0xa4] sm:$0xf]
    %v71 = vld [vmem:[%s1 + $0xa8] sm:$0xf]
    %v72 = vld [vmem:[%s1 + $0xac] sm:$0xf]
    %v73 = vld [vmem:[%s1 + $0xb0] sm:$0xf]
    %v74 = vld [vmem:[%s1 + $0xb4] sm:$0xf]
    %v75 = vld [vmem:[%s1 + $0xb8] sm:$0xf]
    %v76 = vld [vmem:[%s1 + $0xbc] sm:$0xf]
    %v77 = vld [vmem:[%s1 + $0xc0] sm:$0xf]
    %v78 = vld [vmem:[%s1 + $0xc4] sm:$0xf]
    %v79 = vld [vmem:[%s1 + $0xc8] sm:$0xf]
    %v80 = vld [vmem:[%s1 + $0xcc] sm:$0xf]
    %v81 = vld [vmem:[%s1 + $0xd0] sm:$0xf]
    %v82 = vld [vmem:[%s1 + $0xd4] sm:$0xf]
    %v83 = vld [vmem:[%s1 + $0xd8] sm:$0xf]
    %v84 = vld [vmem:[%s1 + $0xdc] sm:$0xf]
    %v85 = vld [vmem:[%s1 + $0xe0] sm:$0xf]
    %v86 = vld [vmem:[%s1 + $0xe4] sm:$0xf]
    %v87 = vld [vmem:[%s1 + $0xe8] sm:$0xf]
    %v88 = vld [vmem:[%s1 + $0xec] sm:$0xf]
    %v89 = vld [vmem:[%s1 + $0xf0] sm:$0xf]
    %v90 = vld [vmem:[%s1 + $0xf4] sm:$0xf]
    %v91 = vld [vmem:[%s1 + $0xf8] sm:$0xf]
    %v92 = vld [vmem:[%s1 + $0xfc] sm:$0xf]
    %v93 = vld [vmem:[%s1 + $0x100] sm:$0xf]
    %v94 = vld [vmem:[%s1 + $0x104] sm:$0xf]
    %v95 = vld [vmem:[%s1 + $0x108] sm:$0xf]
    %v96 = vld [vmem:[%s1 + $0x10c] sm:$0xf]
    %v97 = vld [vmem:[%s1 + $0x110] sm:$0xf]
    %v98 = vld [vmem:[%s1 + $0x114] sm:$0xf]
    %v99 = vld [vmem:[%s1 + $0x118] sm:$0xf]
    %v100 = vld [vmem:[%s1 + $0x11c] sm:$0xf]
    %v101 = vld [vmem:[%s1 + $0x120] sm:$0xf]
    %v102 = vld [vmem:[%s1 + $0x124] sm:$0xf]
    %v103 = vld [vmem:[%s1 + $0x128] sm:$0xf]
    %v104 = vld [vmem:[%s1 + $0x12c] sm:$0xf]
    %v105 = vld [vmem:[%s1 + $0x130] sm:$0xf]
    %v106 = vld [vmem:[%s1 + $0x134] sm:$0xf]
    %v107 = vld [vmem:[%s1 + $0x138] sm:$0xf]
    %v108 = vld [vmem:[%s1 + $0x13c] sm:$0xf]
    %v109 = vld [vmem:[%s1 + $0x140] sm:$0xf]
    %v110 = vld [vmem:[%s1 + $0x144] sm:$0xf]
    %v111 = vld [vmem:[%s1 + $0x148] sm:$0xf]
    %v112 = vld [vmem:[%s1 + $0x14c] sm:$0xf]
    %v113 = vld [vmem:[%s1 + $0x150] sm:$0xf]
    %v114 = vld [vmem:[%s1 + $0x154] sm:$0xf]
    %v115 = vld [vmem:[%s1 + $0x158] sm:$0xf]
    %v116 = vld [vmem:[%s1 + $0x15c] sm:$0xf]
    %v117 = vld [vmem:[%s1 + $0x160] sm:$0xf]
    %v118 = vld [vmem:[%s1 + $0x164] sm:$0xf]
    %v119 = vld [vmem:[%s1 + $0x168] sm:$0xf]
    %v120 = vld [vmem:[%s1 + $0x16c] sm:$0xf]
    %v121 = vld [vmem:[%s1 + $0x170] sm:$0xf]
    %v122 = vld [vmem:[%s1 + $0x174] sm:$0xf]
    %v123 = vld [vmem:[%s1 + $0x178] sm:$0xf]
    %v124 = vld [vmem:[%s1 + $0x17c] sm:$0xf]
    %v125 = vld [vmem:[%s1 + $0x180] sm:$0xf]
    %v126 = vld [vmem:[%s1 + $0x184] sm:$0xf]
    %v127 = vld [vmem:[%s2] sm:$0x1]
    %v129 = vlaneseq
    %v130 = vshrl.u32 %v129, 7
    %v131 = vsub.s32 0, %v130
    %v132 = vrot.slane %v127, %v131
    %v142 = vcombine.low %v21, %v22
    %v143 = vcombine.high %v21, %v22
    %v144 = vcombine.low %v23, %v24
    %v145 = vcombine.high %v23, %v24
    %v146 = vcombine.low %v25, %v26
    %v147 = vcombine.high %v25, %v26
    %v148 = vcombine.low %v27, %v28
    %v149 = vcombine.high %v27, %v28
    %v151 = vunpack.c.l.s4 1966171168
    %v152 = vunpack.c.0.s8 %v151
    %v153 = vlaneseq
    %v154 = vshrl.u32 %v153, 7
    %v155 = vsub.s32 %v152, %v154
    %v156 = vrot.slane %v142, %v155
    %v158 = vunpack.c.l.s4 1966171168
    %v159 = vunpack.c.0.s8 %v158
    %v160 = vlaneseq
    %v161 = vshrl.u32 %v160, 7
    %v162 = vsub.s32 %v159, %v161
    %v163 = vrot.slane %v143, %v162
    %v165 = vunpack.c.l.s4 1966171168
    %v166 = vunpack.c.0.s8 %v165
    %v167 = vlaneseq
    %v168 = vshrl.u32 %v167, 7
    %v169 = vsub.s32 %v166, %v168
    %v170 = vrot.slane %v144, %v169
    %v172 = vunpack.c.l.s4 1966171168
    %v173 = vunpack.c.0.s8 %v172
    %v174 = vlaneseq
    %v175 = vshrl.u32 %v174, 7
    %v176 = vsub.s32 %v173, %v175
    %v177 = vrot.slane %v145, %v176
    %v179 = vunpack.c.l.s4 1966171168
    %v180 = vunpack.c.0.s8 %v179
    %v181 = vlaneseq
    %v182 = vshrl.u32 %v181, 7
    %v183 = vsub.s32 %v180, %v182
    %v184 = vrot.slane %v146, %v183
    %v186 = vunpack.c.l.s4 1966171168
    %v187 = vunpack.c.0.s8 %v186
    %v188 = vlaneseq
    %v189 = vshrl.u32 %v188, 7
    %v190 = vsub.s32 %v187, %v189
    %v191 = vrot.slane %v147, %v190
    %v193 = vunpack.c.l.s4 1966171168
    %v194 = vunpack.c.0.s8 %v193
    %v195 = vlaneseq
    %v196 = vshrl.u32 %v195, 7
    %v197 = vsub.s32 %v194, %v196
    %v198 = vrot.slane %v148, %v197
    %v200 = vunpack.c.l.s4 1966171168
    %v201 = vunpack.c.0.s8 %v200
    %v202 = vlaneseq
    %v203 = vshrl.u32 %v202, 7
    %v204 = vsub.s32 %v201, %v203
    %v205 = vrot.slane %v149, %v204
    %v206 = vcombine.low %v156, %v170
    %v207 = vcombine.high %v156, %v170
    %v208 = vcombine.low %v163, %v177
    %v209 = vcombine.high %v163, %v177
    %v210 = vcombine.low %v184, %v198
    %v211 = vcombine.high %v184, %v198
    %v212 = vcombine.low %v191, %v205
    %v213 = vcombine.high %v191, %v205
    %v215 = vunpack.c.l.s4 1966171168
    %v216 = vunpack.c.0.s8 %v215
    %v217 = vlaneseq
    %v218 = vshrl.u32 %v217, 7
    %v219 = vsub.s32 %v216, %v218
    %v220 = vrot.slane %v206, %v219
    %v222 = vunpack.c.l.s4 1966171168
    %v223 = vunpack.c.0.s8 %v222
    %v224 = vlaneseq
    %v225 = vshrl.u32 %v224, 7
    %v226 = vsub.s32 %v223, %v225
    %v227 = vrot.slane %v208, %v226
    %v229 = vunpack.c.l.s4 1966171168
    %v230 = vunpack.c.0.s8 %v229
    %v231 = vlaneseq
    %v232 = vshrl.u32 %v231, 7
    %v233 = vsub.s32 %v230, %v232
    %v234 = vrot.slane %v207, %v233
    %v236 = vunpack.c.l.s4 1966171168
    %v237 = vunpack.c.0.s8 %v236
    %v238 = vlaneseq
    %v239 = vshrl.u32 %v238, 7
    %v240 = vsub.s32 %v237, %v239
    %v241 = vrot.slane %v209, %v240
    %v243 = vunpack.c.l.s4 1966171168
    %v244 = vunpack.c.0.s8 %v243
    %v245 = vlaneseq
    %v246 = vshrl.u32 %v245, 7
    %v247 = vsub.s32 %v244, %v246
    %v248 = vrot.slane %v210, %v247
    %v250 = vunpack.c.l.s4 1966171168
    %v251 = vunpack.c.0.s8 %v250
    %v252 = vlaneseq
    %v253 = vshrl.u32 %v252, 7
    %v254 = vsub.s32 %v251, %v253
    %v255 = vrot.slane %v212, %v254
    %v257 = vunpack.c.l.s4 1966171168
    %v258 = vunpack.c.0.s8 %v257
    %v259 = vlaneseq
    %v260 = vshrl.u32 %v259, 7
    %v261 = vsub.s32 %v258, %v260
    %v262 = vrot.slane %v211, %v261
    %v264 = vunpack.c.l.s4 1966171168
    %v265 = vunpack.c.0.s8 %v264
    %v266 = vlaneseq
    %v267 = vshrl.u32 %v266, 7
    %v268 = vsub.s32 %v265, %v267
    %v269 = vrot.slane %v213, %v268
    %v270 = vcombine.low %v220, %v248
    %v271 = vcombine.high %v220, %v248
    %v272 = vcombine.low %v227, %v255
    %v273 = vcombine.high %v227, %v255
    %v274 = vcombine.low %v234, %v262
    %v275 = vcombine.high %v234, %v262
    %v276 = vcombine.low %v241, %v269
    %v381 = vunpack.c.l.b16 %v29
    %v382 = vunpack.c.l.b16 %v30
    %v383 = vunpack.c.l.b16 %v31
    %v384 = vunpack.c.l.b16 %v32
    %v385 = vunpack.c.l.b16 %v33
    %v386 = vunpack.c.l.b16 %v34
    %v387 = vunpack.c.l.b16 %v35
    %v388 = vunpack.c.l.b16 %v36
    %v389 = vunpack.c.l.b16 %v37
    %v390 = vunpack.c.l.b16 %v38
    %v391 = vunpack.c.l.b16 %v39
    %v392 = vunpack.c.l.b16 %v40
    %v393 = vunpack.c.l.b16 %v41
    %v394 = vunpack.c.l.b16 %v42
    %v395 = vunpack.c.l.b16 %v43
    %v396 = vunpack.c.l.b16 %v44
    %v397 = vunpack.c.l.b16 %v45
    %v398 = vunpack.c.l.b16 %v46
    %v399 = vunpack.c.l.b16 %v47
    %v400 = vunpack.c.l.b16 %v48
    %v401 = vunpack.c.l.b16 %v49
    %v402 = vunpack.c.l.b16 %v50
    %v403 = vunpack.c.l.b16 %v51
    %v404 = vunpack.c.l.b16 %v52
    %v405 = vunpack.c.l.b16 %v53
    %v406 = vunpack.c.l.b16 %v54
    %v407 = vunpack.c.l.b16 %v55
    %v408 = vunpack.c.l.b16 %v56
    %v409 = vunpack.c.l.b16 %v57
    %v410 = vunpack.c.l.b16 %v58
    %v411 = vunpack.c.l.b16 %v59
    %v412 = vunpack.c.l.b16 %v60
    %v413 = vunpack.c.l.b16 %v61
    %v414 = vunpack.c.l.b16 %v62
    %v415 = vunpack.c.l.b16 %v63
    %v416 = vunpack.c.l.b16 %v64
    %v417 = vunpack.c.l.b16 %v65
    %v418 = vunpack.c.l.b16 %v66
    %v419 = vunpack.c.l.b16 %v67
    %v420 = vunpack.c.l.b16 %v68
    %v421 = vunpack.c.l.b16 %v69
    %v422 = vunpack.c.l.b16 %v70
    %v423 = vunpack.c.l.b16 %v71
    %v424 = vunpack.c.l.b16 %v72
    %v425 = vunpack.c.l.b16 %v73
    %v426 = vunpack.c.l.b16 %v74
    %v427 = vunpack.c.l.b16 %v75
    %v428 = vunpack.c.l.b16 %v76
    %v429 = vunpack.c.l.b16 %v77
    %v430 = vunpack.c.l.b16 %v78
    %v431 = vunpack.c.l.b16 %v79
    %v432 = vunpack.c.l.b16 %v80
    %v433 = vunpack.c.l.b16 %v81
    %v434 = vunpack.c.l.b16 %v82
    %v435 = vunpack.c.l.b16 %v83
    %v436 = vunpack.c.l.b16 %v84
    %v437 = vunpack.c.l.b16 %v85
    %v438 = vunpack.c.l.b16 %v86
    %v439 = vunpack.c.l.b16 %v87
    %v440 = vunpack.c.l.b16 %v88
    %v441 = vunpack.c.l.b16 %v89
    %v442 = vunpack.c.l.b16 %v90
    %v443 = vunpack.c.l.b16 %v91
    %v444 = vunpack.c.l.b16 %v92
    %v445 = vunpack.c.l.b16 %v93
    %v446 = vunpack.c.l.b16 %v94
    %v447 = vunpack.c.l.b16 %v95
    %v448 = vunpack.c.l.b16 %v96
    %v449 = vunpack.c.l.b16 %v97
    %v450 = vunpack.c.l.b16 %v98
    %v451 = vunpack.c.l.b16 %v99
    %v452 = vunpack.c.l.b16 %v100
    %v453 = vunpack.c.l.b16 %v101
    %v454 = vunpack.c.l.b16 %v102
    %v455 = vunpack.c.l.b16 %v103
    %v456 = vunpack.c.l.b16 %v104
    %v457 = vunpack.c.l.b16 %v105
    %v458 = vunpack.c.l.b16 %v106
    %v459 = vunpack.c.l.b16 %v107
    %v460 = vunpack.c.l.b16 %v108
    %v461 = vunpack.c.l.b16 %v109
    %v462 = vunpack.c.l.b16 %v110
    %v463 = vunpack.c.l.b16 %v111
    %v464 = vunpack.c.l.b16 %v112
    %v465 = vunpack.c.l.b16 %v113
    %v466 = vunpack.c.l.b16 %v114
    %v467 = vunpack.c.l.b16 %v115
    %v468 = vunpack.c.l.b16 %v116
    %v469 = vunpack.c.l.b16 %v117
    %v470 = vunpack.c.l.b16 %v118
    %v471 = vunpack.c.l.b16 %v119
    %v472 = vunpack.c.l.b16 %v120
    %v473 = vunpack.c.l.b16 %v121
    %v474 = vunpack.c.l.b16 %v122
    %v475 = vunpack.c.l.b16 %v123
    %v476 = vunpack.c.l.b16 %v124
    %v477 = vunpack.c.l.b16 %v125
    %v478 = vunpack.c.l.b16 %v126
    %v479 = vpack.c.b16 %v382, %v381
    %v480 = vpack.c.b16 %v384, %v383
    %v481 = vpack.c.b16 %v386, %v385
    %v482 = vpack.c.b16 %v388, %v387
    %v483 = vpack.c.b16 %v390, %v389
    %v484 = vpack.c.b16 %v392, %v391
    %v485 = vpack.c.b16 %v394, %v393
    %v486 = vpack.c.b16 %v396, %v395
    %v487 = vpack.c.b16 %v398, %v397
    %v488 = vpack.c.b16 %v400, %v399
    %v489 = vpack.c.b16 %v402, %v401
    %v490 = vpack.c.b16 %v404, %v403
    %v491 = vpack.c.b16 %v406, %v405
    %v492 = vpack.c.b16 %v408, %v407
    %v493 = vpack.c.b16 %v410, %v409
    %v494 = vpack.c.b16 %v412, %v411
    %v495 = vpack.c.b16 %v414, %v413
    %v496 = vpack.c.b16 %v416, %v415
    %v497 = vpack.c.b16 %v418, %v417
    %v498 = vpack.c.b16 %v420, %v419
    %v499 = vpack.c.b16 %v422, %v421
    %v500 = vpack.c.b16 %v424, %v423
    %v501 = vpack.c.b16 %v426, %v425
    %v502 = vpack.c.b16 %v428, %v427
    %v503 = vpack.c.b16 %v430, %v429
    %v504 = vpack.c.b16 %v432, %v431
    %v505 = vpack.c.b16 %v434, %v433
    %v506 = vpack.c.b16 %v436, %v435
    %v507 = vpack.c.b16 %v438, %v437
    %v508 = vpack.c.b16 %v440, %v439
    %v509 = vpack.c.b16 %v442, %v441
    %v510 = vpack.c.b16 %v444, %v443
    %v511 = vpack.c.b16 %v446, %v445
    %v512 = vpack.c.b16 %v448, %v447
    %v513 = vpack.c.b16 %v450, %v449
    %v514 = vpack.c.b16 %v452, %v451
    %v515 = vpack.c.b16 %v454, %v453
    %v516 = vpack.c.b16 %v456, %v455
    %v517 = vpack.c.b16 %v458, %v457
    %v518 = vpack.c.b16 %v460, %v459
    %v519 = vpack.c.b16 %v462, %v461
    %v520 = vpack.c.b16 %v464, %v463
    %v521 = vpack.c.b16 %v466, %v465
    %v522 = vpack.c.b16 %v468, %v467
    %v523 = vpack.c.b16 %v470, %v469
    %v524 = vpack.c.b16 %v472, %v471
    %v525 = vpack.c.b16 %v474, %v473
    %v526 = vpack.c.b16 %v476, %v475
    %v527 = vpack.c.b16 %v478, %v477
    %vm577 = vcmask 130048
    %v579 = vsel %vm577, %v273, 0
    %581 = vmatprep.subr.bf16.mxu0 0
    %582 = vmatpush1.bf16.msra.mxu0 %v486
    %583 = vmatprep.subr.bf16.mxu0 0
    %584 = vmatpush1.bf16.msra.mxu0 %v485
    %585 = vmatprep.subr.bf16.mxu0 0
    %586 = vmatpush1.bf16.msra.mxu0 %v484
    %587 = vmatprep.subr.bf16.mxu0 0
    %588 = vmatpush1.bf16.msra.mxu0 %v483
    %589 = vmatprep.subr.bf16.mxu0 0
    %590 = vmatpush1.bf16.msra.mxu0 %v482
    %591 = vmatprep.subr.bf16.mxu0 0
    %592 = vmatpush1.bf16.msra.mxu0 %v481
    %593 = vmatprep.subr.bf16.mxu0 0
    %594 = vmatpush1.bf16.msra.mxu0 %v480
    %595 = vmatprep.subr.bf16.mxu0 0
    %596 = vmatpush1.bf16.msra.mxu0 %v479
    %597 = vmatprep.subr.bf16.mxu0 0
    %598 = vmatpush2.bf16.msra.mxu0 %v494
    %599 = vmatprep.subr.bf16.mxu0 0
    %600 = vmatpush2.bf16.msra.mxu0 %v493
    %601 = vmatprep.subr.bf16.mxu0 0
    %602 = vmatpush2.bf16.msra.mxu0 %v492
    %603 = vmatprep.subr.bf16.mxu0 0
    %604 = vmatpush2.bf16.msra.mxu0 %v491
    %605 = vmatprep.subr.bf16.mxu0 0
    %606 = vmatpush2.bf16.msra.mxu0 %v490
    %607 = vmatprep.subr.bf16.mxu0 0
    %608 = vmatpush2.bf16.msra.mxu0 %v489
    %609 = vmatprep.subr.bf16.mxu0 0
    %610 = vmatpush2.bf16.msra.mxu0 %v488
    %611 = vmatprep.subr.bf16.mxu0 0
    %612 = vmatpush2.bf16.msra.mxu0 %v487
    %613 = vmatprep.mubr.bf16.mxu0 %v274
    %614 = vmatmul.mubr.bf16.gmra.mxu0 %v270
    %v615 = vpop.f32.mrf.mxu0
    %v616 = vadd.f32 %v132, %v615
    %v617 = vpop.f32.mrf.mxu0
    %v618 = vpop.f32.mrf.mxu0
    %v619 = vadd.f32 %v132, %v618
    %v620 = vpop.f32.mrf.mxu0
    %621 = vdwg.mxu0
    %622 = vmatprep.subr.bf16.mxu0 0
    %623 = vmatpush1.bf16.msra.mxu0 %v502
    %624 = vmatprep.subr.bf16.mxu0 0
    %625 = vmatpush1.bf16.msra.mxu0 %v501
    %626 = vmatprep.subr.bf16.mxu0 0
    %627 = vmatpush1.bf16.msra.mxu0 %v500
    %628 = vmatprep.subr.bf16.mxu0 0
    %629 = vmatpush1.bf16.msra.mxu0 %v499
    %630 = vmatprep.subr.bf16.mxu0 0
    %631 = vmatpush1.bf16.msra.mxu0 %v498
    %632 = vmatprep.subr.bf16.mxu0 0
    %633 = vmatpush1.bf16.msra.mxu0 %v497
    %634 = vmatprep.subr.bf16.mxu0 0
    %635 = vmatpush1.bf16.msra.mxu0 %v496
    %636 = vmatprep.subr.bf16.mxu0 0
    %637 = vmatpush1.bf16.msra.mxu0 %v495
    %638 = vmatprep.subr.bf16.mxu0 0
    %639 = vmatpush2.bf16.msra.mxu0 %v510
    %640 = vmatprep.subr.bf16.mxu0 0
    %641 = vmatpush2.bf16.msra.mxu0 %v509
    %642 = vmatprep.subr.bf16.mxu0 0
    %643 = vmatpush2.bf16.msra.mxu0 %v508
    %644 = vmatprep.subr.bf16.mxu0 0
    %645 = vmatpush2.bf16.msra.mxu0 %v507
    %646 = vmatprep.subr.bf16.mxu0 0
    %647 = vmatpush2.bf16.msra.mxu0 %v506
    %648 = vmatprep.subr.bf16.mxu0 0
    %649 = vmatpush2.bf16.msra.mxu0 %v505
    %650 = vmatprep.subr.bf16.mxu0 0
    %651 = vmatpush2.bf16.msra.mxu0 %v504
    %652 = vmatprep.subr.bf16.mxu0 0
    %653 = vmatpush2.bf16.msra.mxu0 %v503
    %654 = vmatprep.mubr.bf16.mxu0 %v275
    %655 = vmatmul.mubr.bf16.gmra.mxu0 %v271
    %v656 = vpop.f32.mrf.mxu0
    %v657 = vadd.f32 %v616, %v656
    %v658 = vpop.f32.mrf.mxu0
    %v659 = vpop.f32.mrf.mxu0
    %v660 = vadd.f32 %v619, %v659
    %v661 = vpop.f32.mrf.mxu0
    %662 = vdwg.mxu0
    %663 = vmatprep.subr.bf16.mxu0 0
    %664 = vmatpush1.bf16.msra.mxu0 %v518
    %665 = vmatprep.subr.bf16.mxu0 0
    %666 = vmatpush1.bf16.msra.mxu0 %v517
    %667 = vmatprep.subr.bf16.mxu0 0
    %668 = vmatpush1.bf16.msra.mxu0 %v516
    %669 = vmatprep.subr.bf16.mxu0 0
    %670 = vmatpush1.bf16.msra.mxu0 %v515
    %671 = vmatprep.subr.bf16.mxu0 0
    %672 = vmatpush1.bf16.msra.mxu0 %v514
    %673 = vmatprep.subr.bf16.mxu0 0
    %674 = vmatpush1.bf16.msra.mxu0 %v513
    %675 = vmatprep.subr.bf16.mxu0 0
    %676 = vmatpush1.bf16.msra.mxu0 %v512
    %677 = vmatprep.subr.bf16.mxu0 0
    %678 = vmatpush1.bf16.msra.mxu0 %v511
    %679 = vmatprep.subr.bf16.mxu0 0
    %680 = vmatpush2.bf16.msra.mxu0 %v526
    %681 = vmatprep.subr.bf16.mxu0 0
    %682 = vmatpush2.bf16.msra.mxu0 %v525
    %683 = vmatprep.subr.bf16.mxu0 0
    %684 = vmatpush2.bf16.msra.mxu0 %v524
    %685 = vmatprep.subr.bf16.mxu0 0
    %686 = vmatpush2.bf16.msra.mxu0 %v523
    %687 = vmatprep.subr.bf16.mxu0 0
    %688 = vmatpush2.bf16.msra.mxu0 %v522
    %689 = vmatprep.subr.bf16.mxu0 0
    %690 = vmatpush2.bf16.msra.mxu0 %v521
    %691 = vmatprep.subr.bf16.mxu0 0
    %692 = vmatpush2.bf16.msra.mxu0 %v520
    %693 = vmatprep.subr.bf16.mxu0 0
    %694 = vmatpush2.bf16.msra.mxu0 %v519
    %695 = vmatprep.mubr.bf16.mxu0 %v276
    %696 = vmatmul.mubr.bf16.gmra.mxu0 %v272
    %v697 = vpop.f32.mrf.mxu0
    %v698 = vadd.f32 %v657, %v697
    %v699 = vpop.f32.mrf.mxu0
    %v700 = vpop.f32.mrf.mxu0
    %v701 = vadd.f32 %v660, %v700
    %v702 = vpop.f32.mrf.mxu0
    %703 = vdwg.mxu0
    %704 = vmatprep.subr.bf16.mxu0 0
    %705 = vmatpush1.bf16.msra.mxu0 0
    %706 = vmatprep.subr.bf16.mxu0 0
    %707 = vmatpush1.bf16.msra.mxu0 0
    %708 = vmatprep.subr.bf16.mxu0 0
    %709 = vmatpush1.bf16.msra.mxu0 0
    %710 = vmatprep.subr.bf16.mxu0 0
    %711 = vmatpush1.bf16.msra.mxu0 0
    %712 = vmatprep.subr.bf16.mxu0 0
    %713 = vmatpush1.bf16.msra.mxu0 0
    %714 = vmatprep.subr.bf16.mxu0 0
    %715 = vmatpush1.bf16.msra.mxu0 0
    %716 = vmatprep.subr.bf16.mxu0 0
    %717 = vmatpush1.bf16.msra.mxu0 0
    %718 = vmatprep.subr.bf16.mxu0 0
    %719 = vmatpush1.bf16.msra.mxu0 %v527
    %720 = vmatprep.subr.bf16.mxu0 0
    %721 = vmatpush2.bf16.msra.mxu0 0
    %722 = vmatprep.subr.bf16.mxu0 0
    %723 = vmatpush2.bf16.msra.mxu0 0
    %724 = vmatprep.subr.bf16.mxu0 0
    %725 = vmatpush2.bf16.msra.mxu0 0
    %726 = vmatprep.subr.bf16.mxu0 0
    %727 = vmatpush2.bf16.msra.mxu0 0
    %728 = vmatprep.subr.bf16.mxu0 0
    %729 = vmatpush2.bf16.msra.mxu0 0
    %730 = vmatprep.subr.bf16.mxu0 0
    %731 = vmatpush2.bf16.msra.mxu0 0
    %732 = vmatprep.subr.bf16.mxu0 0
    %733 = vmatpush2.bf16.msra.mxu0 0
    %734 = vmatprep.subr.bf16.mxu0 0
    %735 = vmatpush2.bf16.msra.mxu0 0
    %736 = vmatprep.mubr.bf16.mxu0 0
    %737 = vmatmul.mubr.bf16.gmra.mxu0 %v579
    %v738 = vpop.f32.mrf.mxu0
    %v739 = vadd.f32 %v698, %v738
    %v740 = vpop.f32.mrf.mxu0
    %v741 = vpop.f32.mrf.mxu0
    %v742 = vadd.f32 %v701, %v741
    %v743 = vpop.f32.mrf.mxu0
    %744 = vdwg.mxu0
    %v745 = vmax.f32 %v739, 0.0
    %v746 = vmax.f32 %v742, 0.0
    %v747 = vld [vmem:[%s3] sm:$0xff]
    %v748 = vld [vmem:[%s3 + $0x8] sm:$0xff]
    %v749 = vld [vmem:[%s3 + $0x10] sm:$0xff]
    %v750 = vld [vmem:[%s3 + $0x18] sm:$0xff]
    %v751 = vld [vmem:[%s3 + $0x20] sm:$0xff]
    %v752 = vld [vmem:[%s3 + $0x28] sm:$0xff]
    %v753 = vld [vmem:[%s3 + $0x30] sm:$0xff]
    %v754 = vld [vmem:[%s3 + $0x38] sm:$0xff]
    %v755 = vld [vmem:[%s3 + $0x40] sm:$0xff]
    %v756 = vld [vmem:[%s3 + $0x48] sm:$0xff]
    %v757 = vld [vmem:[%s3 + $0x50] sm:$0xff]
    %v758 = vld [vmem:[%s3 + $0x58] sm:$0xff]
    %v759 = vld [vmem:[%s3 + $0x60] sm:$0xff]
    %v760 = vld [vmem:[%s3 + $0x68] sm:$0xff]
    %v761 = vld [vmem:[%s3 + $0x70] sm:$0xff]
    %v762 = vld [vmem:[%s3 + $0x78] sm:$0xff]
    %v763 = vld [vmem:[%s4] sm:$0x1]
    %v765 = vlaneseq
    %v766 = vshrl.u32 %v765, 7
    %v767 = vsub.s32 0, %v766
    %v768 = vrot.slane %v763, %v767
    %770 = vmatprep.subr.mxu0 0.0
    %771 = vmatpush1.msra.mxu0 %v762
    %772 = vmatprep.subr.mxu0 0.0
    %773 = vmatpush1.msra.mxu0 %v761
    %774 = vmatprep.subr.mxu0 0.0
    %775 = vmatpush1.msra.mxu0 %v760
    %776 = vmatprep.subr.mxu0 0.0
    %777 = vmatpush1.msra.mxu0 %v759
    %778 = vmatprep.subr.mxu0 0.0
    %779 = vmatpush1.msra.mxu0 %v758
    %780 = vmatprep.subr.mxu0 0.0
    %781 = vmatpush1.msra.mxu0 %v757
    %782 = vmatprep.subr.mxu0 0.0
    %783 = vmatpush1.msra.mxu0 %v756
    %784 = vmatprep.subr.mxu0 0.0
    %785 = vmatpush1.msra.mxu0 %v755
    %786 = vmatprep.subr.mxu0 0.0
    %787 = vmatpush1.msra.mxu0 %v754
    %788 = vmatprep.subr.mxu0 0.0
    %789 = vmatpush1.msra.mxu0 %v753
    %790 = vmatprep.subr.mxu0 0.0
    %791 = vmatpush1.msra.mxu0 %v752
    %792 = vmatprep.subr.mxu0 0.0
    %793 = vmatpush1.msra.mxu0 %v751
    %794 = vmatprep.subr.mxu0 0.0
    %795 = vmatpush1.msra.mxu0 %v750
    %796 = vmatprep.subr.mxu0 0.0
    %797 = vmatpush1.msra.mxu0 %v749
    %798 = vmatprep.subr.mxu0 0.0
    %799 = vmatpush1.msra.mxu0 %v748
    %800 = vmatprep.subr.mxu0 0.0
    %801 = vmatpush1.msra.mxu0 %v747
    %802 = vmatprep.subr.mxu0 0.0
    %803 = vmatpush2.msra.mxu0 0.0
    %804 = vmatprep.subr.mxu0 0.0
    %805 = vmatpush2.msra.mxu0 0.0
    %806 = vmatprep.subr.mxu0 0.0
    %807 = vmatpush2.msra.mxu0 0.0
    %808 = vmatprep.subr.mxu0 0.0
    %809 = vmatpush2.msra.mxu0 0.0
    %810 = vmatprep.subr.mxu0 0.0
    %811 = vmatpush2.msra.mxu0 0.0
    %812 = vmatprep.subr.mxu0 0.0
    %813 = vmatpush2.msra.mxu0 0.0
    %814 = vmatprep.subr.mxu0 0.0
    %815 = vmatpush2.msra.mxu0 0.0
    %816 = vmatprep.subr.mxu0 0.0
    %817 = vmatpush2.msra.mxu0 0.0
    %818 = vmatprep.subr.mxu0 0.0
    %819 = vmatpush2.msra.mxu0 0.0
    %820 = vmatprep.subr.mxu0 0.0
    %821 = vmatpush2.msra.mxu0 0.0
    %822 = vmatprep.subr.mxu0 0.0
    %823 = vmatpush2.msra.mxu0 0.0
    %824 = vmatprep.subr.mxu0 0.0
    %825 = vmatpush2.msra.mxu0 0.0
    %826 = vmatprep.subr.mxu0 0.0
    %827 = vmatpush2.msra.mxu0 0.0
    %828 = vmatprep.subr.mxu0 0.0
    %829 = vmatpush2.msra.mxu0 0.0
    %830 = vmatprep.subr.mxu0 0.0
    %831 = vmatpush2.msra.mxu0 0.0
    %832 = vmatprep.subr.mxu0 0.0
    %833 = vmatpush2.msra.mxu0 0.0
    %834 = vmatprep.mubr.f32.mxu0 0.0
    %835 = vmatmul.mubr.f32.gmra.mxu0 %v745
    %v836 = vpop.f32.mrf.mxu0
    %v837 = vadd.f32 %v768, %v836
    %v838 = vpop.f32.mrf.mxu0
    %839 = vmatprep.mubr.f32.mxu0 0.0
    %840 = vmatmul.mubr.f32.gmra.mxu0 %v746
    %v841 = vpop.f32.mrf.mxu0
    %v842 = vadd.f32 %v768, %v841
    %v843 = vpop.f32.mrf.mxu0
    %844 = vdwg.mxu0
    %v845 = vpack.c.bf16 %v842, %v837
    %v847 = vcombine.high %v845, %v845
    %v849 = vunpack.c.l.s4 1966171168
    %v850 = vunpack.c.0.s8 %v849
    %v851 = vlaneseq
    %v852 = vshrl.u32 %v851, 7
    %v853 = vsub.s32 %v850, %v852
    %v854 = vrot.slane %v845, %v853
    %v856 = vunpack.c.l.s4 1966171168
    %v857 = vunpack.c.0.s8 %v856
    %v858 = vlaneseq
    %v859 = vshrl.u32 %v858, 7
    %v860 = vsub.s32 %v857, %v859
    %v861 = vrot.slane %v847, %v860
    %v862 = vcombine.high %v854, %v854
    %v863 = vcombine.high %v861, %v861
    %v865 = vunpack.c.l.s4 1966171168
    %v866 = vunpack.c.0.s8 %v865
    %v867 = vlaneseq
    %v868 = vshrl.u32 %v867, 7
    %v869 = vsub.s32 %v866, %v868
    %v870 = vrot.slane %v854, %v869
    %v872 = vunpack.c.l.s4 1966171168
    %v873 = vunpack.c.0.s8 %v872
    %v874 = vlaneseq
    %v875 = vshrl.u32 %v874, 7
    %v876 = vsub.s32 %v873, %v875
    %v877 = vrot.slane %v861, %v876
    %v879 = vunpack.c.l.s4 1966171168
    %v880 = vunpack.c.0.s8 %v879
    %v881 = vlaneseq
    %v882 = vshrl.u32 %v881, 7
    %v883 = vsub.s32 %v880, %v882
    %v884 = vrot.slane %v862, %v883
    %v886 = vunpack.c.l.s4 1966171168
    %v887 = vunpack.c.0.s8 %v886
    %v888 = vlaneseq
    %v889 = vshrl.u32 %v888, 7
    %v890 = vsub.s32 %v887, %v889
    %v891 = vrot.slane %v863, %v890
    %v892 = vcombine.high %v870, %v870
    %v893 = vcombine.high %v877, %v877
    %v894 = vcombine.high %v884, %v884
    %v895 = vcombine.high %v891, %v891
    %904 = vst [vmem:[#allocation2] sm:$0x1] %v870
    %905 = vst [vmem:[#allocation2 + $0x1] sm:$0x1] %v884
    %906 = vst [vmem:[#allocation2 + $0x2] sm:$0x1] %v892
    %907 = vst [vmem:[#allocation2 + $0x3] sm:$0x1] %v894
    %908 = vst [vmem:[#allocation2 + $0x4] sm:$0x1] %v877
    %909 = vst [vmem:[#allocation2 + $0x5] sm:$0x1] %v891
    %910 = vst [vmem:[#allocation2 + $0x6] sm:$0x1] %v893
    %911 = vst [vmem:[#allocation2 + $0x7] sm:$0x1] %v895
    // Predicated region
    $region22: #{simple_nn_forward.1} parent=1 // pred_check
      _
    $region23: #{simple_nn_forward.1} parent=1 // pred_check_branch
      %913 = sbr.rel (0) target = $region25
    $region24: #{simple_nn_forward.1} parent=1 // pred_region
      // Predicated region
      $region26: #{simple_nn_forward.1} parent=24 // pred_check
        _
      $region27: #{simple_nn_forward.1} parent=24 // pred_check_branch
        %915 = sbr.rel (0) target = $region29
      $region28: #{simple_nn_forward.1} parent=24 // pred_region
        // Predicated region
        $region30: #{simple_nn_forward.1} parent=28 // pred_check
          _
        $region31: #{simple_nn_forward.1} parent=28 // pred_check_branch
          %917 = sbr.rel target = $region33
        $region32: #{simple_nn_forward.1} parent=28 // pred_region
          // Predicated region
          $region45: #{simple_nn_forward.1} parent=32 // pred_check
            _
          $region46: #{simple_nn_forward.1} parent=32 // pred_check_branch
            %933 = sbr.rel (0) target = $region48
          $region47: #{simple_nn_forward.1} parent=32 // pred_region
            %s935 = ssub.s32 2, 1
            loop: start=0, step=1, limit=1
            $region49: #{simple_nn_forward.1} parent=47 // loop_pre_header
              _
            $region50: #{simple_nn_forward.1} parent=47 // loop_header
              %s937 = sphi 0, %s941
              %p938 = scmp.ge.s32.totalorder %s937, 1
              %s942 = sphi [#allocation2], [#allocation2]
              %s943 = sphi %s5, %s5
            $region51: #{simple_nn_forward.1} parent=47 // loop_header_branch
              %940 = sbr.rel (%p938) target = $region55
            $region52: #{simple_nn_forward.1} parent=47 // loop_body
              %v944 = vld [vmem:[%s942] sm:%s935]
              %945 = vst [vmem:[%s943] sm:%s935] %v944
            $region53: #{simple_nn_forward.1} parent=47 // loop_footer
              %s941 = sadd.s32 1, %s937
            $region54: #{simple_nn_forward.1} parent=47 // loop_footer_branch
              %936 = sbr.rel target = $region50
            $region55: #{simple_nn_forward.1} parent=47 // loop_exit
              _
          $region48: #{simple_nn_forward.1} parent=32 // pred_fallthru
            _
        $region33: #{simple_nn_forward.1} parent=28 // pred_fallthru
          _
        // Predicated region
        $region34: #{simple_nn_forward.1} parent=28 // pred_check
          _
        $region35: #{simple_nn_forward.1} parent=28 // pred_check_branch
          %919 = sbr.rel (0) target = $region37
        $region36: #{simple_nn_forward.1} parent=28 // pred_region
          %s921 = ssub.s32 2, 1
          loop: start=0, step=1, limit=1
          $region38: #{simple_nn_forward.1} parent=36 // loop_pre_header
            _
          $region39: #{simple_nn_forward.1} parent=36 // loop_header
            %s923 = sphi 0, %s927
            %p924 = scmp.ge.s32.totalorder %s923, 1
            %s928 = sphi [#allocation2], [#allocation2]
            %s929 = sphi %s5, %s5
          $region40: #{simple_nn_forward.1} parent=36 // loop_header_branch
            %926 = sbr.rel (%p924) target = $region44
          $region41: #{simple_nn_forward.1} parent=36 // loop_body
            %v930 = vld [vmem:[%s928] sm:%s921]
            %931 = vst [vmem:[%s929] sm:%s921] %v930
          $region42: #{simple_nn_forward.1} parent=36 // loop_footer
            %s927 = sadd.s32 1, %s923
          $region43: #{simple_nn_forward.1} parent=36 // loop_footer_branch
            %922 = sbr.rel target = $region39
          $region44: #{simple_nn_forward.1} parent=36 // loop_exit
            _
        $region37: #{simple_nn_forward.1} parent=28 // pred_fallthru
          _
      $region29: #{simple_nn_forward.1} parent=24 // pred_fallthru
        _
      %946 = vnop
    $region25: #{simple_nn_forward.1} parent=1 // pred_fallthru
      _
    // Predicated region
    $region56: #{simple_nn_forward.1} parent=1 // pred_check
      _
    $region57: #{simple_nn_forward.1} parent=1 // pred_check_branch
      %948 = sbr.rel (0) target = $region59
    $region58: #{simple_nn_forward.1} parent=1 // pred_region
      _
    $region59: #{simple_nn_forward.1} parent=1 // pred_fallthru
      _

</llo_original>
